<compile_context>
chip_gen: v7x
topology: tpu7x:2x2x1
jax: 0.10.0
libtpu: 0.0.40
codegen_flags: <defaults>
</compile_context>

<pallas_src>
import functools
import math

import jax
import jax.numpy as jnp
from jax import lax
from jax.experimental import pallas as pl
from jax.experimental.pallas import tpu as pltpu


# ----------------------------------------------------------------------------
# Kernel 1: fused K / V / class-weighted-Q projections over row tiles of N=B*S.
# ----------------------------------------------------------------------------
def _qkv_projection_kernel(x_ref, w_ref, wq_ref, wkv_ref, bkv_ref,
                           q_ref, k_ref, v_ref):
    # x_ref  : (TILE_N, D)     input rows, input dtype (NOT upcast -> fast MXU path)
    # w_ref  : (TILE_N, C)     per-row class weights, input dtype
    # wq_ref : (C*D + C, D)    packed [Wq[0]^T; ...; Wq[C-1]^T; bq]   (resident)
    # wkv_ref: (D, 2*D)        packed [Wk^T | Wv^T]                   (resident)
    # bkv_ref: (1, 2*D)        packed [bk | bv]
    x = x_ref[...]
    w = w_ref[...]
    d_model = x.shape[1]
    num_classes = w.shape[1]

    # One stacked MXU matmul (K = C*D + C) for the class-dependent query:
    #   q = sum_c w_c * (x @ Wq[c]^T) + sum_c w_c * bq[c]
    xw = jnp.concatenate(
        [w[:, c:c + 1] * x for c in range(num_classes)] + [w], axis=1)
    q = jnp.dot(xw, wq_ref[...], preferred_element_type=jnp.float32)
    q_ref[...] = q.astype(q_ref.dtype)

    # Fused K/V projection: single matmul against the packed (D, 2D) weight.
    kv = jnp.dot(x, wkv_ref[...], preferred_element_type=jnp.float32) + bkv_ref[...]
    k_ref[...] = kv[:, :d_model].astype(k_ref.dtype)
    v_ref[...] = kv[:, d_model:].astype(v_ref.dtype)


# ----------------------------------------------------------------------------
# Kernel 2: per-batch attention over all heads + deferred output projection.
# ----------------------------------------------------------------------------
def _attention_kernel(*refs, scale, num_heads, has_mask):
    if has_mask:
        q_ref, k_ref, v_ref, mask_ref, wo_ref, bo_ref, out_ref = refs
    else:
        q_ref, k_ref, v_ref, wo_ref, bo_ref, out_ref = refs
        mask_ref = None

    d_model = q_ref.shape[-1]
    hd = d_model // num_heads

    if has_mask:
        # Mask arrives as 1.0 = keep / 0.0 = masked; expand the additive bias here
        # (no resident f32 (S,S) bias in HBM/VMEM).
        neg_bias = jnp.where(mask_ref[...] > 0.5, 0.0, -1e30).astype(jnp.float32)

    head_outs = []
    for h in range(num_heads):                       # static unroll, static lane slices
        lo, hi = h * hd, (h + 1) * hd
        qh = q_ref[:, lo:hi]
        kh = k_ref[:, lo:hi]
        vh = v_ref[:, lo:hi]
        s = lax.dot_general(qh, kh, (((1,), (1,)), ((), ())),
                            preferred_element_type=jnp.float32) * scale     # (S, S)
        if has_mask:
            s = s + neg_bias
        # NOTE: a fully-masked row yields a uniform softmax here (PyTorch SDPA gives NaN).
        s = s - jnp.max(s, axis=-1, keepdims=True)
        p = jnp.exp(s)
        l = jnp.sum(p, axis=-1, keepdims=True)
        oh = jnp.dot(p.astype(vh.dtype), vh, preferred_element_type=jnp.float32)  # (S, hd)
        # Fold 1/l into the (S, hd) head output via the EUP reciprocal (not the (S,S) p).
        head_outs.append(oh * pl.reciprocal(l, approx=True))

    attn = jnp.concatenate(head_outs, axis=-1)       # (S, D) f32, no scratch needed
    out = jnp.dot(attn.astype(wo_ref.dtype), wo_ref[...],
                  preferred_element_type=jnp.float32) + bo_ref[...]
    out_ref[...] = out.astype(out_ref.dtype)


# ----------------------------------------------------------------------------
# VMEM-budgeted row-tile size for kernel 1 (safe for v7x's 64 MiB VMEM).
# ----------------------------------------------------------------------------
def _pick_tile_n(n_rows, d_model, n_classes, itemsize, vmem_budget_bytes):
    per_row_stream = (4 * d_model + n_classes) * itemsize          # x, w, q, k, v tiles
    per_row_scratch = (n_classes * d_model + n_classes + 3 * d_model) * 4  # f32 intermediates
    weight_bytes = ((n_classes * d_model + n_classes) * d_model
                    + 2 * d_model * d_model + 2 * d_model) * itemsize
    avail = max(vmem_budget_bytes - 2 * weight_bytes,              # weights are double-buffered
                8 * (2 * per_row_stream + per_row_scratch))
    tile = int(avail // (2 * per_row_stream + per_row_scratch))
    tile = min(tile, 2048)
    if tile >= n_rows:
        return n_rows
    return max(8, (tile // 8) * 8)


# ----------------------------------------------------------------------------
# Wrapper: full ClassDependentQueryAttention forward pass.
# ----------------------------------------------------------------------------
def class_dependent_query_attention(x, conditioning, mask, params, *, num_heads):
    Wq, bq = params["Wq"], params["bq"]       # (C, D, D), (C, D)
    Wk, bk = params["Wk"], params["bk"]       # (D, D), (D,)
    Wv, bv = params["Wv"], params["bv"]
    Wo, bo = params["Wo"], params["bo"]

    B, S, D = x.shape
    C = Wq.shape[0]
    H = num_heads
    N = B * S
    dtype = x.dtype
    itemsize = jnp.dtype(dtype).itemsize

    x_flat = x.reshape(N, D)
    if conditioning is None:
        w_flat = jnp.full((N, C), 1.0 / C, dtype=dtype)
    else:
        w_flat = conditioning[:, :, :C].reshape(N, C).astype(dtype)

    # Host-side weight packing (layout plumbing only):
    #   wq_packed = [Wq[0]^T; ...; Wq[C-1]^T; bq]   (C*D + C, D)
    #   wkv       = [Wk^T | Wv^T]  (D, 2D),  bkv = [bk | bv]  (1, 2D)
    wq_packed = jnp.concatenate(
        [jnp.transpose(Wq, (0, 2, 1)).reshape(C * D, D), bq], axis=0).astype(dtype)
    wkv = jnp.concatenate([Wk.T, Wv.T], axis=1).astype(dtype)
    bkv = jnp.concatenate([bk, bv]).reshape(1, 2 * D).astype(dtype)

    TILE_N = _pick_tile_n(N, D, C, itemsize, vmem_budget_bytes=32 * 1024 * 1024)
    grid_n = pl.cdiv(N, TILE_N)

    rows_d = pl.BlockSpec((TILE_N, D), lambda n: (n, 0))

    qkv_cost = pl.CostEstimate(
        flops=2 * N * D * D * (C + 2),
        transcendentals=0,
        bytes_accessed=itemsize * (N * (4 * D + C)
                                   + (C * D + C) * D + 2 * D * D + 2 * D),
    )

    q_flat, k_flat, v_flat = pl.pallas_call(
        _qkv_projection_kernel,
        out_shape=(jax.ShapeDtypeStruct((N, D), dtype),
                   jax.ShapeDtypeStruct((N, D), dtype),
                   jax.ShapeDtypeStruct((N, D), dtype)),
        grid_spec=pltpu.PrefetchScalarGridSpec(
            num_scalar_prefetch=0,
            grid=(grid_n,),
            in_specs=[
                rows_d,                                          # x rows
                pl.BlockSpec((TILE_N, C), lambda n: (n, 0)),     # class weights
                pl.BlockSpec((C * D + C, D), lambda n: (0, 0)),  # packed Wq^T + bq (resident)
                pl.BlockSpec((D, 2 * D), lambda n: (0, 0)),      # packed [Wk^T|Wv^T] (resident)
                pl.BlockSpec((1, 2 * D), lambda n: (0, 0)),      # [bk|bv]
            ],
            out_specs=[rows_d, rows_d, rows_d],                  # lane-dense (TILE_N, D)
        ),
        compiler_params=pltpu.CompilerParams(
            dimension_semantics=("parallel",),
            vmem_limit_bytes=48 * 1024 * 1024),
        cost_estimate=qkv_cost,
    )(x_flat, w_flat, wq_packed, wkv, bkv)

    # No head transpose between the kernels: the flat (B, S, D) projections are fed
    # straight to kernel 2 (free contiguous reshape), heads are sliced in-kernel.
    q_b = q_flat.reshape(B, S, D)
    k_b = k_flat.reshape(B, S, D)
    v_b = v_flat.reshape(B, S, D)

    has_mask = mask is not None
    wo_t = Wo.T.astype(dtype)                 # (D, D)
    bo_r = bo.reshape(1, D).astype(jnp.float32)
    scale = 1.0 / math.sqrt(D // H)

    attn_cost = pl.CostEstimate(
        flops=B * (4 * S * S * D + 2 * S * D * D),
        transcendentals=B * H * S * S,
        bytes_accessed=itemsize * (4 * B * S * D + D * D
                                   + (S * S if has_mask else 0)) + 4 * D,
    )

    batch_spec = pl.BlockSpec((None, S, D), lambda b: (b, 0, 0))
    in_specs = [batch_spec, batch_spec, batch_spec]
    operands = [q_b, k_b, v_b]
    if has_mask:
        in_specs.append(pl.BlockSpec((S, S), lambda b: (0, 0)))   # compact 0/1 mask (resident)
        operands.append(mask.astype(dtype))
    in_specs += [pl.BlockSpec((D, D), lambda b: (0, 0)),           # Wo^T (resident)
                 pl.BlockSpec((1, D), lambda b: (0, 0))]           # bo
    operands += [wo_t, bo_r]

    out = pl.pallas_call(
        functools.partial(_attention_kernel, scale=scale, num_heads=H,
                          has_mask=has_mask),
        out_shape=jax.ShapeDtypeStruct((B, S, D), dtype),
        grid_spec=pltpu.PrefetchScalarGridSpec(
            num_scalar_prefetch=0,
            grid=(B,),
            in_specs=in_specs,
            out_specs=pl.BlockSpec((None, S, D), lambda b: (b, 0, 0)),
        ),
        compiler_params=pltpu.CompilerParams(
            dimension_semantics=("parallel",),
            vmem_limit_bytes=48 * 1024 * 1024),
        cost_estimate=attn_cost,
    )(*operands)

    return out


# ----------------------------------------------------------------------------
# Pure-JAX reference (mirrors the PyTorch module's forward, eval semantics).
# ----------------------------------------------------------------------------
def ref_forward(x, conditioning, mask, params, num_heads):
    Wq, bq = params["Wq"], params["bq"]
    Wk, bk = params["Wk"], params["bk"]
    Wv, bv = params["Wv"], params["bv"]
    Wo, bo = params["Wo"], params["bo"]
    B, S, D = x.shape
    C = Wq.shape[0]
    H, hd = num_heads, D // num_heads

    k = x @ Wk.T + bk
    v = x @ Wv.T + bv
    qs = [x @ Wq[c].T + bq[c] for c in range(C)]
    if conditioning is None:
        q = sum(qs) / C
    else:
        w = conditioning[:, :, :C]
        q = sum(w[:, :, c][:, :, None] * qs[c] for c in range(C))

    def heads(t):
        return t.reshape(B, S, H, hd).transpose(0, 2, 1, 3)

    qh, kh, vh = heads(q), heads(k), heads(v)
    s = jnp.einsum("bhqd,bhkd->bhqk", qh, kh) / math.sqrt(hd)
    if mask is not None:
        s = s + jnp.where(mask, 0.0, -1e30)[None, None]
    p = jax.nn.softmax(s, axis=-1)
    o = jnp.einsum("bhqk,bhkd->bhqd", p, vh)
    o = o.transpose(0, 2, 1, 3).reshape(B, S, D)
    return o @ Wo.T + bo


if __name__ == "__main__":
    # Small shapes consistent with the module.
    B, S = 2, 8
    d_model, num_heads, num_classes = 32, 4, 3

    key = jax.random.PRNGKey(0)
    keys = jax.random.split(key, 10)

    def uinit(k, shape, fan_in):
        bound = 1.0 / (fan_in ** 0.5)         # nn.Linear default-style init
        return jax.random.uniform(k, shape, jnp.float32, -bound, bound)

    params = dict(
        Wq=uinit(keys[0], (num_classes, d_model, d_model), d_model),
        bq=uinit(keys[1], (num_classes, d_model), d_model),
        Wk=uinit(keys[2], (d_model, d_model), d_model),
        bk=uinit(keys[3], (d_model,), d_model),
        Wv=uinit(keys[4], (d_model, d_model), d_model),
        bv=uinit(keys[5], (d_model,), d_model),
        Wo=uinit(keys[6], (d_model, d_model), d_model),
        bo=uinit(keys[7], (d_model,), d_model),
    )
    x = jax.random.normal(keys[8], (B, S, d_model), jnp.float32)
    conditioning = jax.random.uniform(keys[9], (B, S, num_classes + 2), jnp.float32)
    causal_mask = jnp.tril(jnp.ones((S, S), jnp.float32)) > 0.5

    # Case 1: with conditioning, no mask.
    out1 = jax.block_until_ready(
        class_dependent_query_attention(x, conditioning, None, params,
                                        num_heads=num_heads))
    ref1 = ref_forward(x, conditioning, None, params, num_heads)
    assert out1.shape == (B, S, d_model)
    err1 = float(jnp.max(jnp.abs(out1 - ref1)))
    assert err1 < 5e-2, f"conditioned case mismatch: {err1}"

    # Case 2: conditioning=None (mean over class queries) with a causal bool mask.
    out2 = jax.block_until_ready(
        class_dependent_query_attention(x, None, causal_mask, params,
                                        num_heads=num_heads))
    ref2 = ref_forward(x, None, causal_mask, params, num_heads)
    err2 = float(jnp.max(jnp.abs(out2 - ref2)))
    assert err2 < 5e-2, f"masked case mismatch: {err2}"

    print("KERNEL_OK")
</pallas_src>

<mosaic_0001>
module attributes {stable_mosaic.version = 11 : i64} {
  func.func @_qkv_projection_kernel(%arg0: i32, %arg1: memref<16x32xf32, #tpu.memory_space<vmem>>, %arg2: memref<16x3xf32, #tpu.memory_space<vmem>>, %arg3: memref<99x32xf32, #tpu.memory_space<vmem>>, %arg4: memref<32x64xf32, #tpu.memory_space<vmem>>, %arg5: memref<1x64xf32, #tpu.memory_space<vmem>>, %arg6: memref<16x32xf32, #tpu.memory_space<vmem>>, %arg7: memref<16x32xf32, #tpu.memory_space<vmem>>, %arg8: memref<16x32xf32, #tpu.memory_space<vmem>>) attributes {dimension_semantics = [#tpu.dimension_semantics<parallel>], iteration_bounds = array<i64: 1>, scalar_prefetch = 0 : i64, scratch_operands = 0 : i64, tpu.core_type = #tpu.core_type<tc>, window_params = [{transform_indices = @transform_0, window_bounds = array<i64: 16, 32>}, {transform_indices = @transform_1, window_bounds = array<i64: 16, 3>}, {pipeline_mode = #tpu.pipeline_mode<synchronous>, transform_indices = @transform_2, window_bounds = array<i64: 99, 32>}, {pipeline_mode = #tpu.pipeline_mode<synchronous>, transform_indices = @transform_3, window_bounds = array<i64: 32, 64>}, {pipeline_mode = #tpu.pipeline_mode<synchronous>, transform_indices = @transform_4, window_bounds = array<i64: 1, 64>}, {transform_indices = @transform_5, window_bounds = array<i64: 16, 32>}, {transform_indices = @transform_6, window_bounds = array<i64: 16, 32>}, {transform_indices = @transform_7, window_bounds = array<i64: 16, 32>}]} {
    %c0 = arith.constant 0 : index
    %c0_0 = arith.constant 0 : index
    %0 = vector.load %arg1[%c0, %c0_0] : memref<16x32xf32, #tpu.memory_space<vmem>>, vector<16x32xf32>
    %c0_1 = arith.constant 0 : index
    %c0_2 = arith.constant 0 : index
    %1 = vector.load %arg2[%c0_1, %c0_2] : memref<16x3xf32, #tpu.memory_space<vmem>>, vector<16x3xf32>
    %2 = vector.extract_strided_slice %1 {offsets = [0, 0], sizes = [16, 1], strides = [1, 1]} : vector<16x3xf32> to vector<16x1xf32>
    %3 = vector.broadcast %2 : vector<16x1xf32> to vector<16x32xf32>
    %4 = arith.mulf %3, %0 : vector<16x32xf32>
    %5 = vector.extract_strided_slice %1 {offsets = [0, 1], sizes = [16, 1], strides = [1, 1]} : vector<16x3xf32> to vector<16x1xf32>
    %6 = vector.broadcast %5 : vector<16x1xf32> to vector<16x32xf32>
    %7 = arith.mulf %6, %0 : vector<16x32xf32>
    %8 = vector.extract_strided_slice %1 {offsets = [0, 2], sizes = [16, 1], strides = [1, 1]} : vector<16x3xf32> to vector<16x1xf32>
    %9 = vector.broadcast %8 : vector<16x1xf32> to vector<16x32xf32>
    %10 = arith.mulf %9, %0 : vector<16x32xf32>
    %11 = tpu.concatenate %4, %7, %10, %1 in 1 : vector<16x32xf32>, vector<16x32xf32>, vector<16x32xf32>, vector<16x3xf32> -> vector<16x99xf32>
    %c0_3 = arith.constant 0 : index
    %c0_4 = arith.constant 0 : index
    %12 = vector.load %arg3[%c0_3, %c0_4] : memref<99x32xf32, #tpu.memory_space<vmem>>, vector<99x32xf32>
    %cst = arith.constant dense<0.000000e+00> : vector<16x32xf32>
    %13 = tpu.matmul %11, %12, %cst {dimension_numbers = #tpu.dot_dimension_numbers<[1], [0], [0], [1], [0, 0, 1, 1], [], []>} : vector<16x99xf32>, vector<99x32xf32>, vector<16x32xf32> -> vector<16x32xf32>
    %c0_5 = arith.constant 0 : index
    %c0_6 = arith.constant 0 : index
    %14 = vector.load %arg6[%c0_5, %c0_6] : memref<16x32xf32, #tpu.memory_space<vmem>>, vector<16x32xf32>
    tpu.vector_store %arg6[%c0_5, %c0_6], %13 {strides = array<i32>} : memref<16x32xf32, #tpu.memory_space<vmem>>, vector<16x32xf32>,
    %c0_7 = arith.constant 0 : index
    %c0_8 = arith.constant 0 : index
    %15 = vector.load %arg4[%c0_7, %c0_8] : memref<32x64xf32, #tpu.memory_space<vmem>>, vector<32x64xf32>
    %cst_9 = arith.constant dense<0.000000e+00> : vector<16x64xf32>
    %16 = tpu.matmul %0, %15, %cst_9 {dimension_numbers = #tpu.dot_dimension_numbers<[1], [0], [0], [1], [0, 0, 1, 1], [], []>} : vector<16x32xf32>, vector<32x64xf32>, vector<16x64xf32> -> vector<16x64xf32>
    %c0_10 = arith.constant 0 : index
    %c0_11 = arith.constant 0 : index
    %17 = vector.load %arg5[%c0_10, %c0_11] : memref<1x64xf32, #tpu.memory_space<vmem>>, vector<1x64xf32>
    %18 = vector.broadcast %17 : vector<1x64xf32> to vector<16x64xf32>
    %19 = arith.addf %16, %18 : vector<16x64xf32>
    %20 = vector.extract_strided_slice %19 {offsets = [0, 0], sizes = [16, 32], strides = [1, 1]} : vector<16x64xf32> to vector<16x32xf32>
    %c0_12 = arith.constant 0 : index
    %c0_13 = arith.constant 0 : index
    %21 = vector.load %arg7[%c0_12, %c0_13] : memref<16x32xf32, #tpu.memory_space<vmem>>, vector<16x32xf32>
    tpu.vector_store %arg7[%c0_12, %c0_13], %20 {strides = array<i32>} : memref<16x32xf32, #tpu.memory_space<vmem>>, vector<16x32xf32>,
    %22 = vector.extract_strided_slice %19 {offsets = [0, 32], sizes = [16, 32], strides = [1, 1]} : vector<16x64xf32> to vector<16x32xf32>
    %c0_14 = arith.constant 0 : index
    %c0_15 = arith.constant 0 : index
    %23 = vector.load %arg8[%c0_14, %c0_15] : memref<16x32xf32, #tpu.memory_space<vmem>>, vector<16x32xf32>
    tpu.vector_store %arg8[%c0_14, %c0_15], %22 {strides = array<i32>} : memref<16x32xf32, #tpu.memory_space<vmem>>, vector<16x32xf32>,
    return
  }
  func.func @transform_0(%arg0: i32) -> (i32, i32) {
    %c0_i32 = arith.constant 0 : i32
    %c0_i32_0 = arith.constant 0 : i32
    return %arg0, %c0_i32 : i32, i32
  }
  func.func @transform_1(%arg0: i32) -> (i32, i32) {
    %c0_i32 = arith.constant 0 : i32
    %c0_i32_0 = arith.constant 0 : i32
    return %arg0, %c0_i32 : i32, i32
  }
  func.func @transform_2(%arg0: i32) -> (i32, i32) {
    %c0_i32 = arith.constant 0 : i32
    %c0_i32_0 = arith.constant 0 : i32
    %c0_i32_1 = arith.constant 0 : i32
    return %c0_i32, %c0_i32_0 : i32, i32
  }
  func.func @transform_3(%arg0: i32) -> (i32, i32) {
    %c0_i32 = arith.constant 0 : i32
    %c0_i32_0 = arith.constant 0 : i32
    %c0_i32_1 = arith.constant 0 : i32
    return %c0_i32, %c0_i32_0 : i32, i32
  }
  func.func @transform_4(%arg0: i32) -> (i32, i32) {
    %c0_i32 = arith.constant 0 : i32
    %c0_i32_0 = arith.constant 0 : i32
    %c0_i32_1 = arith.constant 0 : i32
    return %c0_i32, %c0_i32_0 : i32, i32
  }
  func.func @transform_5(%arg0: i32) -> (i32, i32) {
    %c0_i32 = arith.constant 0 : i32
    %c0_i32_0 = arith.constant 0 : i32
    return %arg0, %c0_i32 : i32, i32
  }
  func.func @transform_6(%arg0: i32) -> (i32, i32) {
    %c0_i32 = arith.constant 0 : i32
    %c0_i32_0 = arith.constant 0 : i32
    return %arg0, %c0_i32 : i32, i32
  }
  func.func @transform_7(%arg0: i32) -> (i32, i32) {
    %c0_i32 = arith.constant 0 : i32
    %c0_i32_0 = arith.constant 0 : i32
    return %arg0, %c0_i32 : i32, i32
  }
}

</mosaic_0001>

<llo_original>
// kernel: tpu_custom_call.1
$region0: #{tpu_custom_call.1}
  #allocation0 [shape = 'u32[]', space=smem, size = 0x4, offset = 0x4, fixed_abs, tag = 'smem constant byte address 0x4 - core index']
  #allocation1 [shape = 'u32[144,128]{1,0:T(1,128)}', space=vmem, size = 0x12000, scoped, tag = 'internal scratch']
  %s0 = inlined_call_operand.vmem [shape: f32[16,32], index: 0, kind: input, shape index: {}]
  %s1 = inlined_call_operand.vmem [shape: f32[16,3], index: 1, kind: input, shape index: {}]
  %s2 = inlined_call_operand.vmem [shape: f32[99,32], index: 2, kind: input, shape index: {}]
  %s3 = inlined_call_operand.vmem [shape: f32[32,64], index: 3, kind: input, shape index: {}]
  %s4 = inlined_call_operand.vmem [shape: f32[1,64], index: 4, kind: input, shape index: {}]
  %s5 = inlined_call_operand.hbm [shape: f32[16,32], index: 5, kind: output, shape index: {0}]
  %s6 = inlined_call_operand.hbm [shape: f32[16,32], index: 6, kind: output, shape index: {1}]
  %s7 = inlined_call_operand.hbm [shape: f32[16,32], index: 7, kind: output, shape index: {2}]
  %8 = xla_tuple %s5, %s6, %s7
  %s9 = sld [smem:[#allocation0]]
  $region46: #{tpu_custom_call.1} parent=0
    _
  %s11 = ssub.s32 1, %s9
  %s12 = scalar_select 0, %s11, %s9
  $region1: #{tpu_custom_call.1} parent=0
    #allocation2 [shape = 'u8[8192]{0}', space=vmem, size = 0x2000, scoped, tag = 'output window, operand 0, single buffered']
    #allocation3 [shape = 's32[1]{0}', space=sflag, size = 0x4, scoped, tag = 'scoped memory for tpu_custom_call.1']
    #allocation4 [shape = 'u8[8192]{0}', space=vmem, size = 0x2000, scoped, tag = 'output window, operand 1, single buffered']
    #allocation5 [shape = 's32[1]{0}', space=sflag, size = 0x4, scoped, tag = 'scoped memory for tpu_custom_call.1']
    #allocation6 [shape = 'u8[8192]{0}', space=vmem, size = 0x2000, scoped, tag = 'output window, operand 2, single buffered']
    %13 = vsyncpa [#allocation3], 0
    %14 = vsyncpa [#allocation5], 0
    // Predicated region
    $region2: #{tpu_custom_call.1} parent=1 // pred_check
      _
    $region3: #{tpu_custom_call.1} parent=1 // pred_check_branch
      %16 = sbr.rel (0) target = $region5
    $region4: #{tpu_custom_call.1} parent=1 // pred_region
      _
    $region5: #{tpu_custom_call.1} parent=1 // pred_fallthru
      _
    // Predicated region
    $region6: #{tpu_custom_call.1} parent=1 // pred_check
      _
    $region7: #{tpu_custom_call.1} parent=1 // pred_check_branch
      %18 = sbr.rel (0) target = $region9
    $region8: #{tpu_custom_call.1} parent=1 // pred_region
      _
    $region9: #{tpu_custom_call.1} parent=1 // pred_fallthru
      _
    // Predicated region
    $region10: #{tpu_custom_call.1} parent=1 // pred_check
      _
    $region11: #{tpu_custom_call.1} parent=1 // pred_check_branch
      %20 = sbr.rel (0) target = $region13
    $region12: #{tpu_custom_call.1} parent=1 // pred_region
      _
    $region13: #{tpu_custom_call.1} parent=1 // pred_fallthru
      _
    // Predicated region
    $region14: #{tpu_custom_call.1} parent=1 // pred_check
      _
    $region15: #{tpu_custom_call.1} parent=1 // pred_check_branch
      %22 = sbr.rel (0) target = $region17
    $region16: #{tpu_custom_call.1} parent=1 // pred_region
      _
    $region17: #{tpu_custom_call.1} parent=1 // pred_fallthru
      _
    // Predicated region
    $region18: #{tpu_custom_call.1} parent=1 // pred_check
      _
    $region19: #{tpu_custom_call.1} parent=1 // pred_check_branch
      %24 = sbr.rel (0) target = $region21
    $region20: #{tpu_custom_call.1} parent=1 // pred_region
      _
    $region21: #{tpu_custom_call.1} parent=1 // pred_fallthru
      _
    %v25 = vld [vmem:[%s0] sm:$0xff]
    %v26 = vld [vmem:[%s0 + $0x8] sm:$0xff]
    %v27 = vld [vmem:[%s1] sm:$0xff]
    %v28 = vld [vmem:[%s1 + $0x8] sm:$0xff]
    %30 = vset.pattern.permute.xlu0 0
    %31 = vperm.xlu0 %30, %v27
    %v32 = vpop.permute.xlu0 %31
    %35 = vset.pattern.permute.xlu0 0
    %36 = vperm.xlu0 %35, %v28
    %v37 = vpop.permute.xlu0 %36
    %v39 = vmul.f32 %v32, %v25
    %v40 = vmul.f32 %v37, %v26
    %41 = vset.pattern.permute.xlu0 1
    %42 = vperm.xlu0 %41, %v27
    %v43 = vpop.permute.xlu0 %42
    %45 = vset.pattern.permute.xlu0 1
    %46 = vperm.xlu0 %45, %v28
    %v47 = vpop.permute.xlu0 %46
    %v49 = vmul.f32 %v43, %v25
    %v50 = vmul.f32 %v47, %v26
    %51 = vset.pattern.permute.xlu0 2
    %52 = vperm.xlu0 %51, %v27
    %v53 = vpop.permute.xlu0 %52
    %55 = vset.pattern.permute.xlu0 2
    %56 = vperm.xlu0 %55, %v28
    %v57 = vpop.permute.xlu0 %56
    %v59 = vmul.f32 %v53, %v25
    %v60 = vmul.f32 %v57, %v26
    %63 = vrot.lane.b32.xlu0 %v49, 32
    %v64 = vpop.permute.xlu0 %63
    %65 = vrot.lane.b32.xlu0 %v50, 32
    %v66 = vpop.permute.xlu0 %65
    %71 = vrot.lane.b32.xlu0 %v59, 64
    %v72 = vpop.permute.xlu0 %71
    %73 = vrot.lane.b32.xlu0 %v60, 64
    %v74 = vpop.permute.xlu0 %73
    %77 = vrot.lane.b32.xlu0 %v27, 96
    %v78 = vpop.permute.xlu0 %77
    %79 = vrot.lane.b32.xlu0 %v28, 96
    %v80 = vpop.permute.xlu0 %79
    %vm83 = vcmask 261120
    %v84 = vsel %vm83, %v39, %v64
    %v85 = vsel %vm83, %v40, %v66
    %vm86 = vcmask 523264
    %v87 = vsel %vm86, %v84, %v72
    %v88 = vsel %vm86, %v85, %v74
    %vm89 = vcmask 785408
    %v90 = vsel %vm89, %v87, %v78
    %v91 = vsel %vm89, %v88, %v80
    %v92 = vld [vmem:[%s2] sm:$0xff]
    %v93 = vld [vmem:[%s2 + $0x8] sm:$0xff]
    %v94 = vld [vmem:[%s2 + $0x10] sm:$0xff]
    %v95 = vld [vmem:[%s2 + $0x18] sm:$0xff]
    %v96 = vld [vmem:[%s2 + $0x20] sm:$0xff]
    %v97 = vld [vmem:[%s2 + $0x28] sm:$0xff]
    %v98 = vld [vmem:[%s2 + $0x30] sm:$0xff]
    %v99 = vld [vmem:[%s2 + $0x38] sm:$0xff]
    %v100 = vld [vmem:[%s2 + $0x40] sm:$0xff]
    %v101 = vld [vmem:[%s2 + $0x48] sm:$0xff]
    %v102 = vld [vmem:[%s2 + $0x50] sm:$0xff]
    %v103 = vld [vmem:[%s2 + $0x58] sm:$0xff]
    %v104 = vld [vmem:[%s2 + $0x60] sm:$0x7]
    %vm105 = vcmask 809984
    %v107 = vsel %vm105, %v90, 0
    %v110 = vsel %vm105, %v91, 0
    %vm112 = vcmask 1042432
    %v114 = vsel %vm112, %v104, 0
    %116 = vmatprep.subr.mxu0 0.0
    %117 = vmatpush1.msra.mxu0 %v92
    %118 = vmatprep.subr.mxu0 0.0
    %119 = vmatpush1.msra.mxu0 %v93
    %120 = vmatprep.subr.mxu0 0.0
    %121 = vmatpush1.msra.mxu0 %v94
    %122 = vmatprep.subr.mxu0 0.0
    %123 = vmatpush1.msra.mxu0 %v95
    %124 = vmatprep.subr.mxu0 0.0
    %125 = vmatpush1.msra.mxu0 %v96
    %126 = vmatprep.subr.mxu0 0.0
    %127 = vmatpush1.msra.mxu0 %v97
    %128 = vmatprep.subr.mxu0 0.0
    %129 = vmatpush1.msra.mxu0 %v98
    %130 = vmatprep.subr.mxu0 0.0
    %131 = vmatpush1.msra.mxu0 %v99
    %132 = vmatprep.subr.mxu0 0.0
    %133 = vmatpush1.msra.mxu0 %v100
    %134 = vmatprep.subr.mxu0 0.0
    %135 = vmatpush1.msra.mxu0 %v101
    %136 = vmatprep.subr.mxu0 0.0
    %137 = vmatpush1.msra.mxu0 %v102
    %138 = vmatprep.subr.mxu0 0.0
    %139 = vmatpush1.msra.mxu0 %v103
    %140 = vmatprep.subr.mxu0 0.0
    %141 = vmatpush1.msra.mxu0 %v114
    %142 = vmatprep.subr.mxu0 0.0
    %143 = vmatpush1.msra.mxu0 0.0
    %144 = vmatprep.subr.mxu0 0.0
    %145 = vmatpush1.msra.mxu0 0.0
    %146 = vmatprep.subr.mxu0 0.0
    %147 = vmatpush1.msra.mxu0 0.0
    %148 = vmatprep.subr.mxu0 0.0
    %149 = vmatpush1.msra.mxu0 0.0
    %150 = vmatprep.subr.mxu0 0.0
    %151 = vmatpush1.msra.mxu0 0.0
    %152 = vmatprep.subr.mxu0 0.0
    %153 = vmatpush1.msra.mxu0 0.0
    %154 = vmatprep.subr.mxu0 0.0
    %155 = vmatpush1.msra.mxu0 0.0
    %156 = vmatprep.subr.mxu0 0.0
    %157 = vmatpush1.msra.mxu0 0.0
    %158 = vmatprep.subr.mxu0 0.0
    %159 = vmatpush1.msra.mxu0 0.0
    %160 = vmatprep.subr.mxu0 0.0
    %161 = vmatpush1.msra.mxu0 0.0
    %162 = vmatprep.subr.mxu0 0.0
    %163 = vmatpush1.msra.mxu0 0.0
    %164 = vmatprep.subr.mxu0 0.0
    %165 = vmatpush1.msra.mxu0 0.0
    %166 = vmatprep.subr.mxu0 0.0
    %167 = vmatpush1.msra.mxu0 0.0
    %168 = vmatprep.subr.mxu0 0.0
    %169 = vmatpush1.msra.mxu0 0.0
    %170 = vmatprep.subr.mxu0 0.0
    %171 = vmatpush1.msra.mxu0 0.0
    %172 = vmatprep.subr.mxu0 0.0
    %173 = vmatpush1.msra.mxu0 0.0
    %174 = vmatprep.subr.mxu0 0.0
    %175 = vmatpush1.msra.mxu0 0.0
    %176 = vmatprep.subr.mxu0 0.0
    %177 = vmatpush1.msra.mxu0 0.0
    %178 = vmatprep.subr.mxu0 0.0
    %179 = vmatpush1.msra.mxu0 0.0
    %180 = vmatprep.mubr.f32.mxu0 0.0
    %181 = vmatmul.mubr.f32.gmra.mrb[0].mxu0 %v107
    %v182 = vpop.f32.mrb[0].mxu0
    %v183 = vadd.f32 0.0, %v182
    %v184 = vpop.f32.mrb[0].mxu0
    %185 = vmatprep.mubr.f32.mxu0 0.0
    %186 = vmatmul.mubr.f32.gmra.mrb[0].mxu0 %v110
    %v187 = vpop.f32.mrb[0].mxu0
    %v188 = vadd.f32 0.0, %v187
    %v189 = vpop.f32.mrb[0].mxu0
    %190 = vdwg.mxu0
    %191 = vst.msk [vmem:[#allocation2] sm:$0xff] %vm83, %v183
    %192 = vst.msk [vmem:[#allocation2 + $0x8] sm:$0xff] %vm83, %v188
    %v193 = vld [vmem:[%s3] sm:$0xff]
    %v194 = vld [vmem:[%s3 + $0x8] sm:$0xff]
    %v195 = vld [vmem:[%s3 + $0x10] sm:$0xff]
    %v196 = vld [vmem:[%s3 + $0x18] sm:$0xff]
    %v197 = vld [vmem:[%s4] sm:$0x1]
    %v199 = vlaneseq
    %v200 = vshrl.u32 %v199, 7
    %v201 = vsub.s32 0, %v200
    %v202 = vrot.slane %v197, %v201
    %v205 = vsel %vm83, %v25, 0
    %v208 = vsel %vm83, %v26, 0
    %210 = vmatprep.subr.mxu0 0.0
    %211 = vmatpush1.msra.mxu0 %v193
    %212 = vmatprep.subr.mxu0 0.0
    %213 = vmatpush1.msra.mxu0 %v194
    %214 = vmatprep.subr.mxu0 0.0
    %215 = vmatpush1.msra.mxu0 %v195
    %216 = vmatprep.subr.mxu0 0.0
    %217 = vmatpush1.msra.mxu0 %v196
    %218 = vmatprep.subr.mxu0 0.0
    %219 = vmatpush1.msra.mxu0 0.0
    %220 = vmatprep.subr.mxu0 0.0
    %221 = vmatpush1.msra.mxu0 0.0
    %222 = vmatprep.subr.mxu0 0.0
    %223 = vmatpush1.msra.mxu0 0.0
    %224 = vmatprep.subr.mxu0 0.0
    %225 = vmatpush1.msra.mxu0 0.0
    %226 = vmatprep.subr.mxu0 0.0
    %227 = vmatpush1.msra.mxu0 0.0
    %228 = vmatprep.subr.mxu0 0.0
    %229 = vmatpush1.msra.mxu0 0.0
    %230 = vmatprep.subr.mxu0 0.0
    %231 = vmatpush1.msra.mxu0 0.0
    %232 = vmatprep.subr.mxu0 0.0
    %233 = vmatpush1.msra.mxu0 0.0
    %234 = vmatprep.subr.mxu0 0.0
    %235 = vmatpush1.msra.mxu0 0.0
    %236 = vmatprep.subr.mxu0 0.0
    %237 = vmatpush1.msra.mxu0 0.0
    %238 = vmatprep.subr.mxu0 0.0
    %239 = vmatpush1.msra.mxu0 0.0
    %240 = vmatprep.subr.mxu0 0.0
    %241 = vmatpush1.msra.mxu0 0.0
    %242 = vmatprep.subr.mxu0 0.0
    %243 = vmatpush1.msra.mxu0 0.0
    %244 = vmatprep.subr.mxu0 0.0
    %245 = vmatpush1.msra.mxu0 0.0
    %246 = vmatprep.subr.mxu0 0.0
    %247 = vmatpush1.msra.mxu0 0.0
    %248 = vmatprep.subr.mxu0 0.0
    %249 = vmatpush1.msra.mxu0 0.0
    %250 = vmatprep.subr.mxu0 0.0
    %251 = vmatpush1.msra.mxu0 0.0
    %252 = vmatprep.subr.mxu0 0.0
    %253 = vmatpush1.msra.mxu0 0.0
    %254 = vmatprep.subr.mxu0 0.0
    %255 = vmatpush1.msra.mxu0 0.0
    %256 = vmatprep.subr.mxu0 0.0
    %257 = vmatpush1.msra.mxu0 0.0
    %258 = vmatprep.subr.mxu0 0.0
    %259 = vmatpush1.msra.mxu0 0.0
    %260 = vmatprep.subr.mxu0 0.0
    %261 = vmatpush1.msra.mxu0 0.0
    %262 = vmatprep.subr.mxu0 0.0
    %263 = vmatpush1.msra.mxu0 0.0
    %264 = vmatprep.subr.mxu0 0.0
    %265 = vmatpush1.msra.mxu0 0.0
    %266 = vmatprep.subr.mxu0 0.0
    %267 = vmatpush1.msra.mxu0 0.0
    %268 = vmatprep.subr.mxu0 0.0
    %269 = vmatpush1.msra.mxu0 0.0
    %270 = vmatprep.subr.mxu0 0.0
    %271 = vmatpush1.msra.mxu0 0.0
    %272 = vmatprep.subr.mxu0 0.0
    %273 = vmatpush1.msra.mxu0 0.0
    %274 = vmatprep.mubr.f32.mxu0 0.0
    %275 = vmatmul.mubr.f32.gmra.mrb[0].mxu0 %v205
    %v276 = vpop.f32.mrb[0].mxu0
    %v277 = vadd.f32 %v202, %v276
    %v278 = vpop.f32.mrb[0].mxu0
    %279 = vmatprep.mubr.f32.mxu0 0.0
    %280 = vmatmul.mubr.f32.gmra.mrb[0].mxu0 %v208
    %v281 = vpop.f32.mrb[0].mxu0
    %v282 = vadd.f32 %v202, %v281
    %v283 = vpop.f32.mrb[0].mxu0
    %284 = vdwg.mxu0
    %285 = vst.msk [vmem:[#allocation4] sm:$0xff] %vm83, %v277
    %286 = vst.msk [vmem:[#allocation4 + $0x8] sm:$0xff] %vm83, %v282
    %289 = vrot.lane.b32.xlu0 %v277, 96
    %v290 = vpop.permute.xlu0 %289
    %291 = vrot.lane.b32.xlu0 %v282, 96
    %v292 = vpop.permute.xlu0 %291
    %295 = vst.msk [vmem:[#allocation6] sm:$0xff] %vm83, %v290
    %296 = vst.msk [vmem:[#allocation6 + $0x8] sm:$0xff] %vm83, %v292
    // Predicated region
    $region22: #{tpu_custom_call.1} parent=1 // pred_check
      _
    $region23: #{tpu_custom_call.1} parent=1 // pred_check_branch
      %298 = sbr.rel (0) target = $region25
    $region24: #{tpu_custom_call.1} parent=1 // pred_region
      %s300 = ssub.s32 256, 256
      %301 = vsyncadd [#allocation3], %s300
      %s302 = sshll.u32 [#allocation2], 4
      %s303 = int_to_ptr.vmem [resolvable:$true] %s302
      %308 = dma.vmem_to_hbm [thread:$0]  %s303, 256, %s5, [#allocation3], 128, 128, 8
    $region25: #{tpu_custom_call.1} parent=1 // pred_fallthru
      _
    // Predicated region
    $region26: #{tpu_custom_call.1} parent=1 // pred_check
      _
    $region27: #{tpu_custom_call.1} parent=1 // pred_check_branch
      %310 = sbr.rel (0) target = $region29
    $region28: #{tpu_custom_call.1} parent=1 // pred_region
      %s312 = ssub.s32 256, 256
      %313 = vsyncadd [#allocation5], %s312
      %s314 = sshll.u32 [#allocation4], 4
      %s315 = int_to_ptr.vmem [resolvable:$true] %s314
      %320 = dma.vmem_to_hbm [thread:$0]  %s315, 256, %s6, [#allocation5], 128, 128, 8
    $region29: #{tpu_custom_call.1} parent=1 // pred_fallthru
      _
    // Predicated region
    $region30: #{tpu_custom_call.1} parent=1 // pred_check
      _
    $region31: #{tpu_custom_call.1} parent=1 // pred_check_branch
      %322 = sbr.rel (0) target = $region33
    $region32: #{tpu_custom_call.1} parent=1 // pred_region
      %s324 = ssub.s32 256, 256
      %325 = vsyncadd [#allocation5], %s324
      %s326 = sshll.u32 [#allocation6], 4
      %s327 = int_to_ptr.vmem [resolvable:$true] %s326
      %332 = dma.vmem_to_hbm [thread:$0]  %s327, 256, %s7, [#allocation5], 128, 128, 8
    $region33: #{tpu_custom_call.1} parent=1 // pred_fallthru
      _
    // Predicated region
    $region34: #{tpu_custom_call.1} parent=1 // pred_check
      _
    $region35: #{tpu_custom_call.1} parent=1 // pred_check_branch
      %334 = sbr.rel (0) target = $region37
    $region36: #{tpu_custom_call.1} parent=1 // pred_region
      %335 = dma.done [#allocation3], 256
    $region37: #{tpu_custom_call.1} parent=1 // pred_fallthru
      _
    // Predicated region
    $region38: #{tpu_custom_call.1} parent=1 // pred_check
      _
    $region39: #{tpu_custom_call.1} parent=1 // pred_check_branch
      %337 = sbr.rel (0) target = $region41
    $region40: #{tpu_custom_call.1} parent=1 // pred_region
      %338 = dma.done [#allocation5], 256
    $region41: #{tpu_custom_call.1} parent=1 // pred_fallthru
      _
    // Predicated region
    $region42: #{tpu_custom_call.1} parent=1 // pred_check
      _
    $region43: #{tpu_custom_call.1} parent=1 // pred_check_branch
      %340 = sbr.rel (0) target = $region45
    $region44: #{tpu_custom_call.1} parent=1 // pred_region
      %341 = dma.done [#allocation5], 256
    $region45: #{tpu_custom_call.1} parent=1 // pred_fallthru
      _
    %342 = vsyncpa [#allocation3], 1
    %343 = vsyncpa [#allocation5], 1

</llo_original>
